<compile_context>
chip_gen: v6e
topology: v6e:2x2x1
jax: 0.10.0
libtpu: 0.0.40
codegen_flags: <defaults>
</compile_context>

<pallas_src>
import functools

import jax
import jax.numpy as jnp
from jax import lax
from jax.experimental import pallas as pl
from jax.experimental.pallas import tpu as pltpu

NOT_NODE_OBS = 3
NODE_LEN = 2
EMBED_LEN = 10
N_NODES = 30

ATOL = 1e-8   # torch.isclose defaults
RTOL = 0.1    # third positional arg in the reference module


def _nodewise_kernel(x_ref, tabT_ref, hwm_ref, emb_ref,
                     out_ref, tabT_out_ref, hwm_out_ref):
    xv = x_ref[...]                               # (n, F)  full observation rows
    tabT = tabT_ref[...]                          # (2, N)  node table, lane-major rows
    emb = emb_ref[...]                            # (N, E)  embedding weights
    hwm = hwm_ref[0]                              # scalar int32 high-water mark

    n = xv.shape[0]
    N = tabT.shape[1]

    # Node columns are just lane slices of the fused input (non-node lanes are
    # simply never read; no separate slice/reshape op in the wrapper).
    qcols = [xv[:, NOT_NODE_OBS + c:NOT_NODE_OBS + c + 1] for c in range(NODE_LEN)]

    # ---- get_indices: torch.isclose(query, table, rtol=0.1) over both node dims
    def _close(q, col):
        b = tabT[col:col + 1, :]                  # (1, N) lane-major table row
        return jnp.abs(q - b) <= (ATOL + RTOL * jnp.abs(b))

    found = _close(qcols[0], 0) & _close(qcols[1], 1)           # (n, N)

    col_n = lax.broadcasted_iota(jnp.int32, (n, N), 1)          # table-row ids (lanes)
    indices = jnp.max(jnp.where(found, col_n, -1),
                      axis=1, keepdims=True)                    # (n, 1)

    # ---- register: unmatched nodes get consecutive indices starting at hwm.
    is_new = indices < 0                                        # (n, 1) bool
    is_new_i = is_new.astype(jnp.int32)                         # (n, 1)

    # Exclusive prefix-count of new nodes (VPU selects + XLU reduces); one vreg
    # at n=8.  See TODO at top of file about scaling n.
    ii = lax.broadcasted_iota(jnp.int32, (n, n), 0)
    jj = lax.broadcasted_iota(jnp.int32, (n, n), 1)
    # Row-form copy of is_new via a masked diagonal reduce (avoids a relayout).
    is_new_row = jnp.sum(jnp.where(ii == jj, is_new_i, 0),
                         axis=0, keepdims=True)                 # (1, n)
    offsets = jnp.sum(jnp.where(jj < ii, is_new_row, 0),
                      axis=1, keepdims=True)                    # (n, 1) exclusive count
    num_new = jnp.sum(is_new_i)                                 # scalar

    indices = jnp.where(is_new, hwm + offsets, indices)         # (n, 1) final indices
    hwm_out_ref[0] = hwm + num_new
    # TODO(synk): no guard when hwm + num_new exceeds N_NODES (torch's
    # nn.Embedding would raise); out-of-range rows are silently dropped from
    # the table and their embeddings come back as zeros.

    # ---- scatter newly-registered nodes into the transposed (2, N) table.
    # Single fused (2, N) store; `written` via an int32 reduce.
    scat = (col_n == indices) & is_new                           # (n, N) one-hot per new row
    written = jnp.sum(scat.astype(jnp.int32),
                      axis=0, keepdims=True) > 0                 # (1, N)
    new_vals = jnp.concatenate(
        [jnp.sum(jnp.where(scat, qcols[c], 0.0), axis=0, keepdims=True)
         for c in range(NODE_LEN)], axis=0)                      # (2, N)
    tabT_out_ref[...] = jnp.where(written, new_vals, tabT)       # one store

    # ---- embedding gather: one one-hot matmul on the MXU.  Indices that
    # overflowed the table (>= N) match no lane -> all-zero one-hot row ->
    # zero embedding, matching the previous kernel's behavior.
    onehot = (col_n == indices).astype(jnp.float32)              # (n, N)
    out_ref[...] = jnp.dot(onehot, emb, preferred_element_type=jnp.float32)


@functools.partial(jax.jit, donate_argnums=(1, 2))
def nodewise_embedder_forward(x, node_table_t, node_hwm, embed_weight):
    """Functional equivalent of Nodewise_Embedder.forward.

    node_table_t is the module's `self.nodes` buffer stored transposed as
    (node_len, n_nodes) so table rows are lane-major inside the kernel.
    Returns (embeddings, new_node_table_t, new_node_hwm); the state outputs
    alias (and donate) the state inputs, so the update is in place.
    """
    B, S, F = x.shape
    n = B * S
    # PyTorch reshapes the embeddings back to (batch, embed_len); that is only
    # well-defined when the per-sample node payload is exactly one node.
    assert S * (F - NOT_NODE_OBS) == NODE_LEN, (
        "Nodewise_Embedder semantics require one (node_len,) node per sample")
    x2d = x.reshape(n, F)     # free row-major reshape; node lanes sliced in-kernel

    # Advisory cost hint so XLA can overlap this overhead-bound call.
    bytes_accessed = 4 * (n * F + 2 * NODE_LEN * N_NODES + N_NODES * EMBED_LEN
                          + n * EMBED_LEN + 2)
    flops = 2 * n * N_NODES * EMBED_LEN + 8 * n * N_NODES

    out, new_table_t, new_hwm = pl.pallas_call(
        _nodewise_kernel,
        out_shape=(
            jax.ShapeDtypeStruct((n, EMBED_LEN), jnp.float32),
            jax.ShapeDtypeStruct(node_table_t.shape, node_table_t.dtype),
            jax.ShapeDtypeStruct((1,), jnp.int32),
        ),
        in_specs=[
            pl.BlockSpec(memory_space=pltpu.MemorySpace.VMEM),   # x (whole rows)
            pl.BlockSpec(memory_space=pltpu.MemorySpace.VMEM),   # node table (2, N)
            pl.BlockSpec(memory_space=pltpu.MemorySpace.SMEM),   # hwm scalar
            pl.BlockSpec(memory_space=pltpu.MemorySpace.VMEM),   # embedding weight
        ],
        out_specs=(
            pl.BlockSpec(memory_space=pltpu.MemorySpace.VMEM),
            pl.BlockSpec(memory_space=pltpu.MemorySpace.VMEM),
            pl.BlockSpec(memory_space=pltpu.MemorySpace.SMEM),
        ),
        # P8: state tensors are rewritten every call -> update them in place.
        input_output_aliases={1: 1, 2: 2},
        cost_estimate=pl.CostEstimate(
            flops=flops, transcendentals=0, bytes_accessed=bytes_accessed),
    )(x2d, node_table_t, node_hwm, embed_weight)

    # TODO(synk): for real workloads, fuse this op into its consumer (or batch
    # many timesteps per call) — at n=8 the call is pure launch/DMA overhead.
    return out.reshape(B, EMBED_LEN), new_table_t, new_hwm


def _reference_forward(x, node_table_t, node_hwm, embed_weight):
    """Pure-JAX mirror of the PyTorch module, for the in-script sanity check."""
    B, S, F = x.shape
    n = B * S
    nodes = x.reshape(n, F)[:, NOT_NODE_OBS:]                       # (n, 2)
    table = node_table_t.T                                          # (N, 2)
    close = jnp.abs(nodes[:, None, :] - table[None, :, :]) <= (
        ATOL + RTOL * jnp.abs(table[None, :, :]))
    found = jnp.all(close, axis=2)                                  # (n, N)
    idx = jnp.max(jnp.where(found,
                            jnp.arange(N_NODES, dtype=jnp.int32)[None, :], -1),
                  axis=1)                                           # (n,)
    is_new = idx < 0
    inc = jnp.cumsum(is_new.astype(jnp.int32))
    idx = jnp.where(is_new, node_hwm[0] + inc - is_new.astype(jnp.int32), idx)
    new_hwm = node_hwm + inc[-1]
    scatter_idx = jnp.where(is_new, idx, N_NODES)                   # non-new -> dropped
    new_table = table.at[scatter_idx].set(nodes, mode="drop")
    emb = jnp.where((idx < N_NODES)[:, None],
                    embed_weight[jnp.clip(idx, 0, N_NODES - 1)], 0.0)
    return emb.reshape(B, EMBED_LEN), new_table.T, new_hwm


if __name__ == "__main__":
    key = jax.random.PRNGKey(0)
    k_emb, k_x = jax.random.split(key)

    # Deterministic parameter / state init (mirrors nn.Embedding N(0,1) + -ones table)
    embed_weight = jax.random.normal(k_emb, (N_NODES, EMBED_LEN), dtype=jnp.float32)
    node_table_t = -jnp.ones((NODE_LEN, N_NODES), dtype=jnp.float32)  # transposed layout
    node_hwm = jnp.zeros((1,), dtype=jnp.int32)

    # Input: (B, S, F) = (8, 1, 5) -> 3 non-node obs + one 2-d node per sample
    x = jax.random.normal(k_x, (8, 1, NOT_NODE_OBS + NODE_LEN), dtype=jnp.float32)

    # Reference must be computed before the kernel call: the state args are donated.
    ref_out, ref_table_t, ref_hwm = _reference_forward(
        x, node_table_t, node_hwm, embed_weight)

    out, new_table_t, new_hwm = nodewise_embedder_forward(
        x, node_table_t, node_hwm, embed_weight)
    jax.block_until_ready((out, new_table_t, new_hwm))

    assert out.shape == (8, EMBED_LEN)
    assert new_table_t.shape == (NODE_LEN, N_NODES)
    assert new_hwm.shape == (1,)
    assert jnp.allclose(out, ref_out, atol=1e-5, rtol=1e-5)
    assert jnp.allclose(new_table_t, ref_table_t, atol=1e-5, rtol=1e-5)
    assert int(new_hwm[0]) == int(ref_hwm[0])
    print("KERNEL_OK")
</pallas_src>

<mosaic_0001>
module attributes {stable_mosaic.version = 11 : i64} {
  func.func @_nodewise_kernel(%arg0: memref<8x5xf32, #tpu.memory_space<vmem>>, %arg1: memref<2x30xf32, #tpu.memory_space<vmem>>, %arg2: memref<1xi32, #tpu.memory_space<smem>>, %arg3: memref<30x10xf32, #tpu.memory_space<vmem>>, %arg4: memref<8x10xf32, #tpu.memory_space<vmem>>, %arg5: memref<2x30xf32, #tpu.memory_space<vmem>>, %arg6: memref<1xi32, #tpu.memory_space<smem>>) attributes {dimension_semantics = [], scalar_prefetch = 0 : i64, scratch_operands = 0 : i64, tpu.core_type = #tpu.core_type<tc>} {
    %c0 = arith.constant 0 : index
    %c0_0 = arith.constant 0 : index
    %0 = vector.load %arg0[%c0, %c0_0] : memref<8x5xf32, #tpu.memory_space<vmem>>, vector<8x5xf32>
    %c0_1 = arith.constant 0 : index
    %c0_2 = arith.constant 0 : index
    %1 = vector.load %arg1[%c0_1, %c0_2] : memref<2x30xf32, #tpu.memory_space<vmem>>, vector<2x30xf32>
    %c0_3 = arith.constant 0 : index
    %c0_4 = arith.constant 0 : index
    %2 = vector.load %arg3[%c0_3, %c0_4] : memref<30x10xf32, #tpu.memory_space<vmem>>, vector<30x10xf32>
    %c0_5 = arith.constant 0 : index
    %3 = memref.load %arg2[%c0_5] : memref<1xi32, #tpu.memory_space<smem>>
    %4 = vector.extract_strided_slice %0 {offsets = [0, 3], sizes = [8, 1], strides = [1, 1]} : vector<8x5xf32> to vector<8x1xf32>
    %5 = vector.extract_strided_slice %0 {offsets = [0, 4], sizes = [8, 1], strides = [1, 1]} : vector<8x5xf32> to vector<8x1xf32>
    %6 = vector.extract_strided_slice %1 {offsets = [0, 0], sizes = [1, 30], strides = [1, 1]} : vector<2x30xf32> to vector<1x30xf32>
    %7 = vector.broadcast %4 : vector<8x1xf32> to vector<8x30xf32>
    %8 = vector.broadcast %6 : vector<1x30xf32> to vector<8x30xf32>
    %9 = arith.subf %7, %8 : vector<8x30xf32>
    %10 = math.absf %9 : vector<8x30xf32>
    %11 = math.absf %6 : vector<1x30xf32>
    %cst = arith.constant 1.000000e-01 : f32
    %12 = vector.broadcast %cst : f32 to vector<1x30xf32>
    %13 = arith.mulf %12, %11 : vector<1x30xf32>
    %cst_6 = arith.constant 9.99999993E-9 : f32
    %14 = vector.broadcast %cst_6 : f32 to vector<1x30xf32>
    %15 = arith.addf %14, %13 : vector<1x30xf32>
    %16 = vector.broadcast %15 : vector<1x30xf32> to vector<8x30xf32>
    %17 = arith.cmpf ole, %10, %16 : vector<8x30xf32>
    %18 = vector.extract_strided_slice %1 {offsets = [1, 0], sizes = [1, 30], strides = [1, 1]} : vector<2x30xf32> to vector<1x30xf32>
    %19 = vector.broadcast %5 : vector<8x1xf32> to vector<8x30xf32>
    %20 = vector.broadcast %18 : vector<1x30xf32> to vector<8x30xf32>
    %21 = arith.subf %19, %20 : vector<8x30xf32>
    %22 = math.absf %21 : vector<8x30xf32>
    %23 = math.absf %18 : vector<1x30xf32>
    %cst_7 = arith.constant 1.000000e-01 : f32
    %24 = vector.broadcast %cst_7 : f32 to vector<1x30xf32>
    %25 = arith.mulf %24, %23 : vector<1x30xf32>
    %cst_8 = arith.constant 9.99999993E-9 : f32
    %26 = vector.broadcast %cst_8 : f32 to vector<1x30xf32>
    %27 = arith.addf %26, %25 : vector<1x30xf32>
    %28 = vector.broadcast %27 : vector<1x30xf32> to vector<8x30xf32>
    %29 = arith.cmpf ole, %22, %28 : vector<8x30xf32>
    %30 = arith.andi %17, %29 : vector<8x30xi1>
    %31 = tpu.iota {dimensions = array<i32: 1>} : vector<8x30xi32>
    %c-1_i32 = arith.constant -1 : i32
    %32 = vector.broadcast %c-1_i32 : i32 to vector<8x30xi32>
    %33 = arith.select %30, %31, %32 : vector<8x30xi1>, vector<8x30xi32>
    %cst_9 = arith.constant dense<-2147483648> : vector<8xi32>
    %34 = vector.multi_reduction <maxsi>, %33, %cst_9 [1] : vector<8x30xi32> to vector<8xi32>
    %35 = vector.shape_cast %34 : vector<8xi32> to vector<8x1xi32>
    %c0_i32 = arith.constant 0 : i32
    %36 = vector.broadcast %c0_i32 : i32 to vector<8x1xi32>
    %37 = arith.cmpi slt, %35, %36 : vector<8x1xi32>
    %38 = arith.extui %37 : vector<8x1xi1> to vector<8x1xi32>
    %39 = tpu.iota {dimensions = array<i32: 0>} : vector<8x8xi32>
    %40 = tpu.iota {dimensions = array<i32: 1>} : vector<8x8xi32>
    %41 = arith.cmpi eq, %39, %40 : vector<8x8xi32>
    %c0_i32_10 = arith.constant 0 : i32
    %42 = vector.shape_cast %38 : vector<8x1xi32> to vector<8x1xi32>
    %43 = vector.broadcast %42 : vector<8x1xi32> to vector<8x8xi32>
    %44 = vector.broadcast %c0_i32_10 : i32 to vector<8x8xi32>
    %45 = arith.select %41, %43, %44 : vector<8x8xi1>, vector<8x8xi32>
    %cst_11 = arith.constant dense<0> : vector<8xi32>
    %46 = vector.multi_reduction <add>, %45, %cst_11 [0] : vector<8x8xi32> to vector<8xi32>
    %47 = vector.shape_cast %46 : vector<8xi32> to vector<1x8xi32>
    %48 = arith.cmpi slt, %40, %39 : vector<8x8xi32>
    %c0_i32_12 = arith.constant 0 : i32
    %49 = vector.shape_cast %47 : vector<1x8xi32> to vector<1x8xi32>
    %50 = vector.broadcast %49 : vector<1x8xi32> to vector<8x8xi32>
    %51 = vector.broadcast %c0_i32_12 : i32 to vector<8x8xi32>
    %52 = arith.select %48, %50, %51 : vector<8x8xi1>, vector<8x8xi32>
    %cst_13 = arith.constant dense<0> : vector<8xi32>
    %53 = vector.multi_reduction <add>, %52, %cst_13 [1] : vector<8x8xi32> to vector<8xi32>
    %54 = vector.shape_cast %53 : vector<8xi32> to vector<8x1xi32>
    %55 = vector.shape_cast %38 : vector<8x1xi32> to vector<1x8x1xi32>
    %cst_14 = arith.constant dense<0> : vector<1xi32>
    %56 = vector.multi_reduction <add>, %55, %cst_14 [1, 2] : vector<1x8x1xi32> to vector<1xi32>
    %57 = vector.shape_cast %56 : vector<1xi32> to vector<1x1x1xi32>
    %58 = vector.extract %57[0, 0, 0] : i32 from vector<1x1x1xi32>
    %59 = vector.broadcast %3 : i32 to vector<8x1xi32>
    %60 = arith.addi %59, %54 : vector<8x1xi32>
    %61 = arith.select %37, %60, %35 : vector<8x1xi1>, vector<8x1xi32>
    %62 = arith.addi %3, %58 : i32
    %c0_15 = arith.constant 0 : index
    %63 = memref.load %arg6[%c0_15] : memref<1xi32, #tpu.memory_space<smem>>
    memref.store %62, %arg6[%c0_15] : memref<1xi32, #tpu.memory_space<smem>>
    %64 = vector.broadcast %61 : vector<8x1xi32> to vector<8x30xi32>
    %65 = arith.cmpi eq, %31, %64 : vector<8x30xi32>
    %66 = vector.broadcast %37 : vector<8x1xi1> to vector<8x30xi1>
    %67 = arith.andi %65, %66 : vector<8x30xi1>
    %68 = arith.extui %67 : vector<8x30xi1> to vector<8x30xi32>
    %cst_16 = arith.constant dense<0> : vector<30xi32>
    %69 = vector.multi_reduction <add>, %68, %cst_16 [0] : vector<8x30xi32> to vector<30xi32>
    %70 = vector.shape_cast %69 : vector<30xi32> to vector<1x30xi32>
    %c0_i32_17 = arith.constant 0 : i32
    %71 = vector.broadcast %c0_i32_17 : i32 to vector<1x30xi32>
    %72 = arith.cmpi sgt, %70, %71 : vector<1x30xi32>
    %cst_18 = arith.constant 0.000000e+00 : f32
    %73 = vector.shape_cast %4 : vector<8x1xf32> to vector<8x1xf32>
    %74 = vector.broadcast %73 : vector<8x1xf32> to vector<8x30xf32>
    %75 = vector.broadcast %cst_18 : f32 to vector<8x30xf32>
    %76 = arith.select %67, %74, %75 : vector<8x30xi1>, vector<8x30xf32>
    %cst_19 = arith.constant dense<0.000000e+00> : vector<30xf32>
    %77 = vector.multi_reduction <add>, %76, %cst_19 [0] : vector<8x30xf32> to vector<30xf32>
    %78 = vector.shape_cast %77 : vector<30xf32> to vector<1x30xf32>
    %cst_20 = arith.constant 0.000000e+00 : f32
    %79 = vector.shape_cast %5 : vector<8x1xf32> to vector<8x1xf32>
    %80 = vector.broadcast %79 : vector<8x1xf32> to vector<8x30xf32>
    %81 = vector.broadcast %cst_20 : f32 to vector<8x30xf32>
    %82 = arith.select %67, %80, %81 : vector<8x30xi1>, vector<8x30xf32>
    %cst_21 = arith.constant dense<0.000000e+00> : vector<30xf32>
    %83 = vector.multi_reduction <add>, %82, %cst_21 [0] : vector<8x30xf32> to vector<30xf32>
    %84 = vector.shape_cast %83 : vector<30xf32> to vector<1x30xf32>
    %85 = tpu.concatenate %78, %84 in 0 : vector<1x30xf32>, vector<1x30xf32> -> vector<2x30xf32>
    %86 = vector.shape_cast %72 : vector<1x30xi1> to vector<1x30xi1>
    %87 = vector.broadcast %86 : vector<1x30xi1> to vector<2x30xi1>
    %88 = arith.select %87, %85, %1 : vector<2x30xi1>, vector<2x30xf32>
    %c0_22 = arith.constant 0 : index
    %c0_23 = arith.constant 0 : index
    %89 = vector.load %arg5[%c0_22, %c0_23] : memref<2x30xf32, #tpu.memory_space<vmem>>, vector<2x30xf32>
    tpu.vector_store %arg5[%c0_22, %c0_23], %88 {strides = array<i32>} : memref<2x30xf32, #tpu.memory_space<vmem>>, vector<2x30xf32>,
    %90 = vector.broadcast %61 : vector<8x1xi32> to vector<8x30xi32>
    %91 = arith.cmpi eq, %31, %90 : vector<8x30xi32>
    %92 = arith.extui %91 : vector<8x30xi1> to vector<8x30xi32>
    %93 = arith.sitofp %92 : vector<8x30xi32> to vector<8x30xf32>
    %cst_24 = arith.constant dense<0.000000e+00> : vector<8x10xf32>
    %94 = tpu.matmul %93, %2, %cst_24 {dimension_numbers = #tpu.dot_dimension_numbers<[1], [0], [0], [1], [0, 0, 1, 1], [], []>} : vector<8x30xf32>, vector<30x10xf32>, vector<8x10xf32> -> vector<8x10xf32>
    %c0_25 = arith.constant 0 : index
    %c0_26 = arith.constant 0 : index
    %95 = vector.load %arg4[%c0_25, %c0_26] : memref<8x10xf32, #tpu.memory_space<vmem>>, vector<8x10xf32>
    tpu.vector_store %arg4[%c0_25, %c0_26], %94 {strides = array<i32>} : memref<8x10xf32, #tpu.memory_space<vmem>>, vector<8x10xf32>,
    return
  }
}

</mosaic_0001>

<llo_original>
// kernel: nodewise_embedder_forward.1
$region0: #{nodewise_embedder_forward.1}
  #allocation0 [shape = 'u32[]', space=smem, size = 0x4, offset = 0x4, fixed_abs, tag = 'smem constant byte address 0x4 - core index']
  #allocation1 [shape = 'u32[144,128]{1,0:T(1,128)}', space=vmem, size = 0x12000, scoped, tag = 'internal scratch']
  #allocation2 [shape = 's32[1]{0:T(128)S(6)}', space=smem, size = 0x200, scoped, tag = 'scoped memory for nodewise_embedder_forward.1']
  %s0 = inlined_call_operand.vmem [shape: f32[8,5], index: 0, kind: input, shape index: {}]
  %s1 = inlined_call_operand.hbm [shape: f32[2,30], index: 1, kind: input, shape index: {}, may-alias: {1,5}]
  %s2 = inlined_call_operand.<no memory space> [shape: s32[1], index: 2, kind: input, shape index: {}, may-alias: {2,6}]
  %s3 = inlined_call_operand.vmem [shape: f32[30,10], index: 3, kind: input, shape index: {}]
  %s4 = inlined_call_operand.hbm [shape: f32[8,10], index: 4, kind: output, shape index: {0}]
  %s5 = inlined_call_operand.hbm [shape: f32[2,30], index: 5, kind: output, shape index: {1}, may-alias: {1,5}]
  %s6 = inlined_call_operand.hbm [shape: s32[1], index: 6, kind: output, shape index: {2}, may-alias: {2,6}]
  %7 = xla_tuple %s4, %s5, %s6
  %s8 = sld [smem:[#allocation0]]
  $region46: #{nodewise_embedder_forward.1} parent=0
    _
  %s10 = ssub.s32 1, %s8
  %s11 = scalar_select 0, %s10, %s8
  %12 = sst [smem:[#allocation2]] %s2
  $region1: #{nodewise_embedder_forward.1} parent=0
    #allocation3 [shape = 'u8[1024]{0}', space=vmem, size = 0x400, scoped, tag = 'input window, operand 1, single buffered']
    #allocation4 [shape = 's32[1]{0}', space=sflag, size = 0x4, scoped, tag = 'scoped memory for nodewise_embedder_forward.1']
    #allocation5 [shape = 's32[1]{0}', space=sflag, size = 0x4, scoped, tag = 'scoped memory for nodewise_embedder_forward.1']
    #allocation6 [shape = 's32[1]{0}', space=sflag, size = 0x4, scoped, tag = 'scoped memory for nodewise_embedder_forward.1']
    #allocation7 [shape = 'u8[4096]{0}', space=vmem, size = 0x1000, scoped, tag = 'output window, operand 0, single buffered']
    #allocation8 [shape = 'u8[1024]{0}', space=vmem, size = 0x400, scoped, tag = 'output window, operand 1, single buffered']
    #allocation9 [shape = 's32[1]{0}', space=sflag, size = 0x4, scoped, tag = 'scoped memory for nodewise_embedder_forward.1']
    #allocation10 [shape = 'u8[512]{0}', space=smem, size = 0x200, scoped, tag = 'output window, operand 2, single buffered']
    %13 = vsyncpa [#allocation4], 0
    %14 = vsyncpa [#allocation5], 0
    %15 = vsyncpa [#allocation9], 0
    %16 = vsyncpa [#allocation6], 0
    // Predicated region
    $region2: #{nodewise_embedder_forward.1} parent=1 // pred_check
      _
    $region3: #{nodewise_embedder_forward.1} parent=1 // pred_check_branch
      %18 = sbr.rel (0) target = $region5
    $region4: #{nodewise_embedder_forward.1} parent=1 // pred_region
      _
    $region5: #{nodewise_embedder_forward.1} parent=1 // pred_fallthru
      _
    // Predicated region
    $region6: #{nodewise_embedder_forward.1} parent=1 // pred_check
      _
    $region7: #{nodewise_embedder_forward.1} parent=1 // pred_check_branch
      %20 = sbr.rel (0) target = $region9
    $region8: #{nodewise_embedder_forward.1} parent=1 // pred_region
      %s22 = ssub.s32 32, 32
      %23 = vsyncadd [#allocation4], %s22
      %s25 = sshll.u32 [#allocation3], 4
      %s26 = int_to_ptr.vmem [resolvable:$true] %s25
      %28 = dma.hbm_to_vmem [thread:$0]  %s1, 32, %s26, [#allocation4]
    $region9: #{nodewise_embedder_forward.1} parent=1 // pred_fallthru
      _
    // Predicated region
    $region10: #{nodewise_embedder_forward.1} parent=1 // pred_check
      _
    $region11: #{nodewise_embedder_forward.1} parent=1 // pred_check_branch
      %30 = sbr.rel (0) target = $region13
    $region12: #{nodewise_embedder_forward.1} parent=1 // pred_region
      _
    $region13: #{nodewise_embedder_forward.1} parent=1 // pred_fallthru
      _
    // Predicated region
    $region14: #{nodewise_embedder_forward.1} parent=1 // pred_check
      _
    $region15: #{nodewise_embedder_forward.1} parent=1 // pred_check_branch
      %32 = sbr.rel (0) target = $region17
    $region16: #{nodewise_embedder_forward.1} parent=1 // pred_region
      _
    $region17: #{nodewise_embedder_forward.1} parent=1 // pred_fallthru
      _
    // Predicated region
    $region18: #{nodewise_embedder_forward.1} parent=1 // pred_check
      _
    $region19: #{nodewise_embedder_forward.1} parent=1 // pred_check_branch
      %34 = sbr.rel (0) target = $region21
    $region20: #{nodewise_embedder_forward.1} parent=1 // pred_region
      %35 = dma.done [#allocation4], 32
    $region21: #{nodewise_embedder_forward.1} parent=1 // pred_fallthru
      _
    %v36 = vld [vmem:[%s0] sm:$0xff]
    %v37 = vld [vmem:[#allocation3] sm:$0x3]
    %v38 = vld [vmem:[%s3] sm:$0xff]
    %v39 = vld [vmem:[%s3 + $0x8] sm:$0xff]
    %v40 = vld [vmem:[%s3 + $0x10] sm:$0xff]
    %v41 = vld [vmem:[%s3 + $0x18] sm:$0x3f]
    %s42 = sld [smem:[#allocation2]]
    %44 = vset.pattern.permute.xlu0 3
    %45 = vperm.xlu0 %44, %v36
    %v46 = vpop.permute.xlu0 %45
    %v48 = vlaneseq
    %v49 = vshrl.u32 %v48, 7
    %v50 = vsub.s32 0, %v49
    %v51 = vrot.slane %v37, %v50
    %v52 = vsub.f32 %v46, %v51
    %v53 = vand.u32 2147483647, %v52
    %v54 = vand.u32 2147483647, %v37
    %v55 = vmul.f32 %v54, 0.1
    %v56 = vadd.f32 %v55, 1e-08
    %v57 = vlaneseq
    %v58 = vshrl.u32 %v57, 7
    %v59 = vsub.s32 0, %v58
    %v60 = vrot.slane %v56, %v59
    %vm61 = vcmp.le.f32.partialorder %v53, %v60
    %62 = vset.pattern.permute.xlu0 4
    %63 = vperm.xlu0 %62, %v36
    %v64 = vpop.permute.xlu0 %63
    %v66 = vlaneseq
    %v67 = vshrl.u32 %v66, 7
    %v68 = vsub.s32 1, %v67
    %v69 = vrot.slane %v37, %v68
    %v70 = vsub.f32 %v64, %v69
    %v71 = vand.u32 2147483647, %v70
    %v72 = vlaneseq
    %v73 = vshrl.u32 %v72, 7
    %v74 = vsub.s32 1, %v73
    %v75 = vrot.slane %v56, %v74
    %vm76 = vcmp.le.f32.partialorder %v71, %v75
    %vm77 = vmand %vm61, %vm76
    %v78 = vlaneseq
    %v79 = vand.u32 %v78, 127
    %v80 = vsel %vm77, %v79, 4294967295
    %vm81 = vcmask 244736
    %v82 = vsel %vm81, %v80, 2147483648
    %v83 = vand.u32 %v82, 65535
    %v84 = vshra.s32 %v82, 16
    %v85 = vcvt.s32.f32 %v83
    %v86 = vcvt.s32.f32 %v84
    %87 = vmax.xlane.f32.xlu0 %v86
    %v88 = vpop.xlane.xlu0 %87
    %vm89 = vcmp.eq.f32.partialorder %v86, %v88
    %v90 = vsel %vm89, %v85, -inf
    %91 = vmax.xlane.f32.xlu0 %v90
    %v92 = vpop.xlane.xlu0 %91
    %v93 = vcvt.f32.s32 %v92
    %v94 = vcvt.f32.s32 %v88
    %v95 = vshll.u32 %v94, 16
    %v96 = vadd.s32 %v95, %v93
    %vm97 = vcmp.lt.s32.totalorder %v96, 0
    %v98 = vsel %vm97, 1, 0
    %v99 = vlaneseq
    %v100 = vshrl.u32 %v99, 7
    %vm101 = vcmp.eq.s32.totalorder %v100, %v79
    %v102 = vsel %vm101, %v98, 0
    %vm103 = vcmask 64512
    %v104 = vsel %vm103, %v102, 0
    %v105 = vrot.slane %v104, 4
    %v106 = vadd.s32 %v104, %v105
    %v107 = vrot.slane %v106, 2
    %v108 = vadd.s32 %v106, %v107
    %v109 = vrot.slane %v108, 1
    %v110 = vadd.s32 %v108, %v109
    %vm111 = vcmp.lt.s32.totalorder %v79, %v100
    %v112 = vsel %vm111, %v110, 0
    %v113 = vsel %vm103, %v112, 0
    %v114 = vand.u32 %v113, 65535
    %v115 = vshrl.u32 %v113, 16
    %v116 = vcvt.s32.f32 %v114
    %v117 = vcvt.s32.f32 %v115
    %118 = vadd.xlane.f32.xlu0 %v116
    %v119 = vpop.xlane.xlu0 %118
    %120 = vadd.xlane.f32.xlu0 %v117
    %v121 = vpop.xlane.xlu0 %120
    %v122 = vcvt.f32.s32 %v119
    %v123 = vcvt.f32.s32 %v121
    %v124 = vshll.u32 %v123, 16
    %v125 = vadd.s32 %v124, %v122
    %v126 = vrot.slane %v98, 4
    %v127 = vadd.s32 %v98, %v126
    %v128 = vrot.slane %v127, 2
    %v129 = vadd.s32 %v127, %v128
    %v130 = vrot.slane %v129, 1
    %v131 = vadd.s32 %v129, %v130
    %s132 = vtos %v131
    %v133 = vstv %s42
    %v134 = vadd.s32 %v133, %v125
    %v135 = vsel %vm97, %v134, %v96
    %s136 = sadd.s32 %s42, %s132
    %s137 = scalar_lea.smem [#allocation10], 0
    %138 = sst [smem:[%s137]] %s136
    %vm139 = vcmp.eq.s32.totalorder %v79, %v135
    %vm140 = vcmp.eq.s32.totalorder %v98, 1
    %vm141 = vmand %vm139, %vm140
    %v142 = vsel %vm141, 1, 0
    %v143 = vsel %vm81, %v142, 0
    %v144 = vrot.slane %v143, 4
    %v145 = vadd.s32 %v143, %v144
    %v146 = vrot.slane %v145, 2
    %v147 = vadd.s32 %v145, %v146
    %v148 = vrot.slane %v147, 1
    %v149 = vadd.s32 %v147, %v148
    %vm150 = vcmp.gt.s32.totalorder %v149, 0
    %v151 = vsel %vm141, %v46, 0.0
    %v152 = vsel %vm81, %v151, 0.0
    %v153 = vrot.slane %v152, 4
    %v154 = vadd.f32 %v152, %v153
    %v155 = vrot.slane %v154, 2
    %v156 = vadd.f32 %v154, %v155
    %v157 = vrot.slane %v156, 1
    %v158 = vadd.f32 %v156, %v157
    %v159 = vsel %vm141, %v64, 0.0
    %v160 = vsel %vm81, %v159, 0.0
    %v161 = vrot.slane %v160, 4
    %v162 = vadd.f32 %v160, %v161
    %v163 = vrot.slane %v162, 2
    %v164 = vadd.f32 %v162, %v163
    %v165 = vrot.slane %v164, 1
    %v166 = vadd.f32 %v164, %v165
    %vm167 = vcmask 1040384
    %v168 = vsel %vm167, %v158, %v166
    %v169 = vsel %vm150, 1, 0
    %vm170 = vcmp.eq.s32.totalorder %v169, 1
    %v171 = vsel %vm170, %v168, %v37
    %vm172 = vcmask 238592
    %173 = vst.msk [vmem:[#allocation8] sm:$0x3] %vm172, %v171
    %v174 = vsel %vm139, 1, 0
    %v175 = vcvt.s32.f32 %v174
    %v177 = vsel %vm81, %v175, 0
    %vm179 = vcmask 1045504
    %v181 = vsel %vm179, %v41, 0
    %183 = vmatprep.subr.mxu0 0.0
    %184 = vmatpush1.msra.mxu0 0.0
    %185 = vmatprep.subr.mxu0 0.0
    %186 = vmatpush1.msra.mxu0 0.0
    %187 = vmatprep.subr.mxu0 0.0
    %188 = vmatpush1.msra.mxu0 0.0
    %189 = vmatprep.subr.mxu0 0.0
    %190 = vmatpush1.msra.mxu0 0.0
    %191 = vmatprep.subr.mxu0 0.0
    %192 = vmatpush1.msra.mxu0 0.0
    %193 = vmatprep.subr.mxu0 0.0
    %194 = vmatpush1.msra.mxu0 0.0
    %195 = vmatprep.subr.mxu0 0.0
    %196 = vmatpush1.msra.mxu0 0.0
    %197 = vmatprep.subr.mxu0 0.0
    %198 = vmatpush1.msra.mxu0 0.0
    %199 = vmatprep.subr.mxu0 0.0
    %200 = vmatpush1.msra.mxu0 0.0
    %201 = vmatprep.subr.mxu0 0.0
    %202 = vmatpush1.msra.mxu0 0.0
    %203 = vmatprep.subr.mxu0 0.0
    %204 = vmatpush1.msra.mxu0 0.0
    %205 = vmatprep.subr.mxu0 0.0
    %206 = vmatpush1.msra.mxu0 0.0
    %207 = vmatprep.subr.mxu0 0.0
    %208 = vmatpush1.msra.mxu0 %v181
    %209 = vmatprep.subr.mxu0 0.0
    %210 = vmatpush1.msra.mxu0 %v40
    %211 = vmatprep.subr.mxu0 0.0
    %212 = vmatpush1.msra.mxu0 %v39
    %213 = vmatprep.subr.mxu0 0.0
    %214 = vmatpush1.msra.mxu0 %v38
    %215 = vmatprep.subr.mxu0 0.0
    %216 = vmatpush2.msra.mxu0 0.0
    %217 = vmatprep.subr.mxu0 0.0
    %218 = vmatpush2.msra.mxu0 0.0
    %219 = vmatprep.subr.mxu0 0.0
    %220 = vmatpush2.msra.mxu0 0.0
    %221 = vmatprep.subr.mxu0 0.0
    %222 = vmatpush2.msra.mxu0 0.0
    %223 = vmatprep.subr.mxu0 0.0
    %224 = vmatpush2.msra.mxu0 0.0
    %225 = vmatprep.subr.mxu0 0.0
    %226 = vmatpush2.msra.mxu0 0.0
    %227 = vmatprep.subr.mxu0 0.0
    %228 = vmatpush2.msra.mxu0 0.0
    %229 = vmatprep.subr.mxu0 0.0
    %230 = vmatpush2.msra.mxu0 0.0
    %231 = vmatprep.subr.mxu0 0.0
    %232 = vmatpush2.msra.mxu0 0.0
    %233 = vmatprep.subr.mxu0 0.0
    %234 = vmatpush2.msra.mxu0 0.0
    %235 = vmatprep.subr.mxu0 0.0
    %236 = vmatpush2.msra.mxu0 0.0
    %237 = vmatprep.subr.mxu0 0.0
    %238 = vmatpush2.msra.mxu0 0.0
    %239 = vmatprep.subr.mxu0 0.0
    %240 = vmatpush2.msra.mxu0 0.0
    %241 = vmatprep.subr.mxu0 0.0
    %242 = vmatpush2.msra.mxu0 0.0
    %243 = vmatprep.subr.mxu0 0.0
    %244 = vmatpush2.msra.mxu0 0.0
    %245 = vmatprep.subr.mxu0 0.0
    %246 = vmatpush2.msra.mxu0 0.0
    %247 = vmatprep.mubr.f32.mxu0 0.0
    %248 = vmatmul.mubr.f32.gmra.mxu0 %v177
    %v249 = vpop.f32.mrf.mxu0
    %v250 = vadd.f32 0.0, %v249
    %v251 = vpop.f32.mrf.mxu0
    %252 = vdwg.mxu0
    %vm253 = vcmask 80896
    %254 = vst.msk [vmem:[#allocation7] sm:$0xff] %vm253, %v250
    // Predicated region
    $region22: #{nodewise_embedder_forward.1} parent=1 // pred_check
      _
    $region23: #{nodewise_embedder_forward.1} parent=1 // pred_check_branch
      %256 = sbr.rel (0) target = $region25
    $region24: #{nodewise_embedder_forward.1} parent=1 // pred_region
      %s258 = ssub.s32 128, 128
      %259 = vsyncadd [#allocation5], %s258
      %s261 = sshll.u32 [#allocation7], 4
      %s262 = int_to_ptr.vmem [resolvable:$true] %s261
      %264 = dma.vmem_to_hbm [thread:$0]  %s262, 128, %s4, [#allocation5]
    $region25: #{nodewise_embedder_forward.1} parent=1 // pred_fallthru
      _
    // Predicated region
    $region26: #{nodewise_embedder_forward.1} parent=1 // pred_check
      _
    $region27: #{nodewise_embedder_forward.1} parent=1 // pred_check_branch
      %266 = sbr.rel (0) target = $region29
    $region28: #{nodewise_embedder_forward.1} parent=1 // pred_region
      %s268 = ssub.s32 32, 32
      %269 = vsyncadd [#allocation9], %s268
      %s271 = sshll.u32 [#allocation8], 4
      %s272 = int_to_ptr.vmem [resolvable:$true] %s271
      %274 = dma.vmem_to_hbm [thread:$0]  %s272, 32, %s5, [#allocation9]
    $region29: #{nodewise_embedder_forward.1} parent=1 // pred_fallthru
      _
    // Predicated region
    $region30: #{nodewise_embedder_forward.1} parent=1 // pred_check
      _
    $region31: #{nodewise_embedder_forward.1} parent=1 // pred_check_branch
      %276 = sbr.rel (0) target = $region33
    $region32: #{nodewise_embedder_forward.1} parent=1 // pred_region
      %s278 = ssub.s32 16, 16
      %279 = vsyncadd [#allocation6], %s278
      %282 = dma.smem_to_hbm [#allocation10], 16, %s6, [#allocation6]
    $region33: #{nodewise_embedder_forward.1} parent=1 // pred_fallthru
      _
    // Predicated region
    $region34: #{nodewise_embedder_forward.1} parent=1 // pred_check
      _
    $region35: #{nodewise_embedder_forward.1} parent=1 // pred_check_branch
      %284 = sbr.rel (0) target = $region37
    $region36: #{nodewise_embedder_forward.1} parent=1 // pred_region
      %285 = dma.done [#allocation5], 128
    $region37: #{nodewise_embedder_forward.1} parent=1 // pred_fallthru
      _
    // Predicated region
    $region38: #{nodewise_embedder_forward.1} parent=1 // pred_check
      _
    $region39: #{nodewise_embedder_forward.1} parent=1 // pred_check_branch
      %287 = sbr.rel (0) target = $region41
    $region40: #{nodewise_embedder_forward.1} parent=1 // pred_region
      %288 = dma.done [#allocation9], 32
    $region41: #{nodewise_embedder_forward.1} parent=1 // pred_fallthru
      _
    // Predicated region
    $region42: #{nodewise_embedder_forward.1} parent=1 // pred_check
      _
    $region43: #{nodewise_embedder_forward.1} parent=1 // pred_check_branch
      %290 = sbr.rel (0) target = $region45
    $region44: #{nodewise_embedder_forward.1} parent=1 // pred_region
      %291 = dma.done [#allocation6], 16
    $region45: #{nodewise_embedder_forward.1} parent=1 // pred_fallthru
      _
    %292 = sfence
    %293 = vsyncpa [#allocation4], 1
    %294 = vsyncpa [#allocation5], 1
    %295 = vsyncpa [#allocation9], 1
    %296 = vsyncpa [#allocation6], 1

</llo_original>
